<compile_context>
chip_gen: v7x
topology: tpu7x:2x2x1
jax: 0.10.0
libtpu: 0.0.40
codegen_flags: <defaults>
</compile_context>

<pallas_src>
import functools

import jax
import jax.numpy as jnp
from jax import lax
from jax.experimental import pallas as pl
from jax.experimental.pallas import tpu as pltpu


def _round_up(n: int, m: int) -> int:
    return ((n + m - 1) // m) * m


def _cdiv(a: int, b: int) -> int:
    return (a + b - 1) // b


def mlp_kernel(x_ref, w1_ref, b1_ref, w2_ref, b2_ref, w3_ref, b3_ref, o_ref):
    # x_ref: (TB, in_dim) natural layout. Contract in_dim of both operands so the
    # result lands batch-on-lanes: (H1, TB). No HBM-side transpose of x needed.
    # NOTE: default-precision f32 dots lower to multi-pass bf16 on the MXU; pass
    # precision=lax.Precision.HIGHEST here if strict fp32 (PyTorch) parity matters.
    h1 = lax.dot_general(
        w1_ref[...], x_ref[...],
        dimension_numbers=(((1,), (1,)), ((), ())),
        preferred_element_type=jnp.float32)
    h1 = jnp.maximum(h1 + b1_ref[...], 0.0)
    # TODO(synk): dropout is identity (eval-mode semantics); add
    # pltpu.prng_seed/prng_random_bits masking for training parity if needed.
    h2 = jnp.dot(w2_ref[...], h1, preferred_element_type=jnp.float32)
    h2 = jnp.maximum(h2 + b2_ref[...], 0.0)
    # fc_3 (output width 1): VPU multiply + sublane reduction instead of an N=1
    # MXU matmul; (1, TB) result is lane-dense -> unmasked stores.
    out = jnp.sum(w3_ref[...] * h2, axis=0, keepdims=True) + b3_ref[0]
    o_ref[...] = out.astype(o_ref.dtype)


@functools.partial(jax.jit, static_argnames=("block_b",))
def mlp_forward(x, w1, b1, w2, b2, w3, b3, *, block_b=2048):
    """Forward pass. Weights in PyTorch layout: w* = (out, in), b* = (out,)."""
    B, in_dim = x.shape
    h1_dim = w1.shape[0]
    h2_dim = w2.shape[0]

    weight_bytes = 4 * (h1_dim * in_dim + h1_dim
                        + h2_dim * h1_dim + h2_dim + h2_dim)

    # ---- batch tile selection (all static Python ints) ----------------------
    # Pad only to the 128-lane grain (no-op copy when already aligned), NOT to a
    # multiple of the tile; ragged last blocks are handled by the grid.
    bp = _round_up(B, 128)
    tb = min(_round_up(max(block_b, 1), 128), bp)   # force a 128-multiple tile
    # Ensure >= 2 grid steps when the batch allows, so ("parallel",) can shard
    # across the two v7x TensorCores (harmless on single-TC v5e/v6e).
    if bp >= 256:
        tb = min(tb, _round_up(_cdiv(bp, 2), 128))

    # Conservative VMEM budget (v7x: 64 MiB physical): double-buffered x/out
    # tiles + (default double-buffered) resident weights.
    def _vmem_need(t):
        x_tile = 4 * t * in_dim
        out_tile = 4 * 8 * t             # (1, t) block pads to 8 sublanes
        return 2 * (x_tile + out_tile) + 2 * weight_bytes

    budget = 40 * 1024 * 1024
    while tb > 128 and _vmem_need(tb) > budget:
        tb = _round_up(tb // 2, 128)

    grid = _cdiv(bp, tb)
    vmem_limit = int(min(48 * 1024 * 1024,
                         max(16 * 1024 * 1024, _vmem_need(tb) + (8 << 20))))

    xp = jnp.pad(x, ((0, bp - B), (0, 0)))   # natural layout; no transpose

    flops = 2 * bp * (in_dim * h1_dim + h1_dim * h2_dim + h2_dim)
    bytes_accessed = 4 * (bp * in_dim + bp) + weight_bytes + 4

    out = pl.pallas_call(
        mlp_kernel,
        out_shape=jax.ShapeDtypeStruct((1, bp), jnp.float32),
        grid_spec=pltpu.PrefetchScalarGridSpec(
            num_scalar_prefetch=0,
            grid=(grid,),
            in_specs=[
                pl.BlockSpec((tb, in_dim), lambda i: (i, 0)),       # x tile
                pl.BlockSpec((h1_dim, in_dim), lambda i: (0, 0)),   # w1 (resident)
                pl.BlockSpec((h1_dim, 1), lambda i: (0, 0)),        # b1
                pl.BlockSpec((h2_dim, h1_dim), lambda i: (0, 0)),   # w2 (resident)
                pl.BlockSpec((h2_dim, 1), lambda i: (0, 0)),        # b2
                pl.BlockSpec((h2_dim, 1), lambda i: (0, 0)),        # w3 column
                pl.BlockSpec(memory_space=pltpu.MemorySpace.SMEM),  # b3 scalar
            ],
            out_specs=pl.BlockSpec((1, tb), lambda i: (0, i)),
        ),
        compiler_params=pltpu.CompilerParams(
            dimension_semantics=("parallel",),
            vmem_limit_bytes=vmem_limit,
        ),
        cost_estimate=pl.CostEstimate(
            flops=flops, transcendentals=0, bytes_accessed=bytes_accessed),
    )(
        xp,
        w1,
        b1.reshape(h1_dim, 1),
        w2,
        b2.reshape(h2_dim, 1),
        w3.reshape(h2_dim, 1),
        b3.reshape(1),
    )
    # Padded batch columns carry relu(b) garbage; they are sliced off here.
    return out[0, :B]  # == .squeeze(dim=1)


def init_linear(key, in_dim, out_dim):
    """Deterministic init mimicking torch.nn.Linear (PyTorch [out, in] layout)."""
    kw, kb = jax.random.split(key)
    bound = 1.0 / float(in_dim) ** 0.5
    w = jax.random.uniform(kw, (out_dim, in_dim), jnp.float32, -bound, bound)
    b = jax.random.uniform(kb, (out_dim,), jnp.float32, -bound, bound)
    return w, b


if __name__ == "__main__":
    # Small shapes consistent with the module: batch=8, in_dim=32,
    # hidden_dim_1 = hidden_dim_2 = 32 (the reference MLP requires
    # hidden_dim_1 == hidden_dim_2 for fc_3 to be shape-consistent).
    B, IN_DIM, H1, H2 = 8, 32, 32, 32

    key = jax.random.PRNGKey(0)
    kx, k1, k2, k3 = jax.random.split(key, 4)

    x = jax.random.normal(kx, (B, IN_DIM), jnp.float32)
    w1, b1 = init_linear(k1, IN_DIM, H1)
    w2, b2 = init_linear(k2, H1, H2)
    w3, b3 = init_linear(k3, H2, 1)

    y = mlp_forward(x, w1, b1, w2, b2, w3, b3)
    jax.block_until_ready(y)

    # Pure-JAX reference (PyTorch nn.Linear semantics: y = x @ W.T + b).
    ref = jnp.maximum(x @ w1.T + b1, 0.0)
    ref = jnp.maximum(ref @ w2.T + b2, 0.0)
    ref = (ref @ w3.T + b3)[:, 0]
    assert y.shape == (B,)
    assert jnp.allclose(y, ref, atol=1e-5), "mismatch vs reference"

    print("KERNEL_OK")
</pallas_src>

<mosaic_0001>
module attributes {stable_mosaic.version = 11 : i64} {
  func.func @mlp_kernel(%arg0: i32, %arg1: memref<128x32xf32, #tpu.memory_space<vmem>>, %arg2: memref<32x32xf32, #tpu.memory_space<vmem>>, %arg3: memref<32x1xf32, #tpu.memory_space<vmem>>, %arg4: memref<32x32xf32, #tpu.memory_space<vmem>>, %arg5: memref<32x1xf32, #tpu.memory_space<vmem>>, %arg6: memref<32x1xf32, #tpu.memory_space<vmem>>, %arg7: memref<1xf32, #tpu.memory_space<smem>>, %arg8: memref<1x128xf32, #tpu.memory_space<vmem>>) attributes {dimension_semantics = [#tpu.dimension_semantics<parallel>], iteration_bounds = array<i64: 1>, scalar_prefetch = 0 : i64, scratch_operands = 0 : i64, tpu.core_type = #tpu.core_type<tc>, window_params = [{transform_indices = @transform_0, window_bounds = array<i64: 128, 32>}, {pipeline_mode = #tpu.pipeline_mode<synchronous>, transform_indices = @transform_1, window_bounds = array<i64: 32, 32>}, {pipeline_mode = #tpu.pipeline_mode<synchronous>, transform_indices = @transform_2, window_bounds = array<i64: 32, 1>}, {pipeline_mode = #tpu.pipeline_mode<synchronous>, transform_indices = @transform_3, window_bounds = array<i64: 32, 32>}, {pipeline_mode = #tpu.pipeline_mode<synchronous>, transform_indices = @transform_4, window_bounds = array<i64: 32, 1>}, {pipeline_mode = #tpu.pipeline_mode<synchronous>, transform_indices = @transform_5, window_bounds = array<i64: 32, 1>}, {transform_indices = @transform_6, window_bounds = array<i64: 1>}, {transform_indices = @transform_7, window_bounds = array<i64: 1, 128>}]} {
    %c0 = arith.constant 0 : index
    %c0_0 = arith.constant 0 : index
    %0 = vector.load %arg2[%c0, %c0_0] : memref<32x32xf32, #tpu.memory_space<vmem>>, vector<32x32xf32>
    %c0_1 = arith.constant 0 : index
    %c0_2 = arith.constant 0 : index
    %1 = vector.load %arg1[%c0_1, %c0_2] : memref<128x32xf32, #tpu.memory_space<vmem>>, vector<128x32xf32>
    %cst = arith.constant dense<0.000000e+00> : vector<32x128xf32>
    %2 = tpu.matmul %0, %1, %cst {dimension_numbers = #tpu.dot_dimension_numbers<[1], [1], [0], [0], [0, 0, 1, 0], [], []>} : vector<32x32xf32>, vector<128x32xf32>, vector<32x128xf32> -> vector<32x128xf32>
    %c0_3 = arith.constant 0 : index
    %c0_4 = arith.constant 0 : index
    %3 = vector.load %arg3[%c0_3, %c0_4] : memref<32x1xf32, #tpu.memory_space<vmem>>, vector<32x1xf32>
    %4 = vector.broadcast %3 : vector<32x1xf32> to vector<32x128xf32>
    %5 = arith.addf %2, %4 : vector<32x128xf32>
    %cst_5 = arith.constant 0.000000e+00 : f32
    %6 = vector.broadcast %cst_5 : f32 to vector<32x128xf32>
    %7 = arith.maximumf %5, %6 : vector<32x128xf32>
    %c0_6 = arith.constant 0 : index
    %c0_7 = arith.constant 0 : index
    %8 = vector.load %arg4[%c0_6, %c0_7] : memref<32x32xf32, #tpu.memory_space<vmem>>, vector<32x32xf32>
    %cst_8 = arith.constant dense<0.000000e+00> : vector<32x128xf32>
    %9 = tpu.matmul %8, %7, %cst_8 {dimension_numbers = #tpu.dot_dimension_numbers<[1], [0], [0], [1], [0, 0, 1, 1], [], []>} : vector<32x32xf32>, vector<32x128xf32>, vector<32x128xf32> -> vector<32x128xf32>
    %c0_9 = arith.constant 0 : index
    %c0_10 = arith.constant 0 : index
    %10 = vector.load %arg5[%c0_9, %c0_10] : memref<32x1xf32, #tpu.memory_space<vmem>>, vector<32x1xf32>
    %11 = vector.broadcast %10 : vector<32x1xf32> to vector<32x128xf32>
    %12 = arith.addf %9, %11 : vector<32x128xf32>
    %cst_11 = arith.constant 0.000000e+00 : f32
    %13 = vector.broadcast %cst_11 : f32 to vector<32x128xf32>
    %14 = arith.maximumf %12, %13 : vector<32x128xf32>
    %c0_12 = arith.constant 0 : index
    %c0_13 = arith.constant 0 : index
    %15 = vector.load %arg6[%c0_12, %c0_13] : memref<32x1xf32, #tpu.memory_space<vmem>>, vector<32x1xf32>
    %16 = vector.broadcast %15 : vector<32x1xf32> to vector<32x128xf32>
    %17 = arith.mulf %16, %14 : vector<32x128xf32>
    %cst_14 = arith.constant dense<0.000000e+00> : vector<128xf32>
    %18 = vector.multi_reduction <add>, %17, %cst_14 [0] : vector<32x128xf32> to vector<128xf32>
    %19 = vector.shape_cast %18 : vector<128xf32> to vector<1x128xf32>
    %c0_15 = arith.constant 0 : index
    %20 = memref.load %arg7[%c0_15] : memref<1xf32, #tpu.memory_space<smem>>
    %21 = vector.broadcast %20 : f32 to vector<1x128xf32>
    %22 = arith.addf %19, %21 : vector<1x128xf32>
    %c0_16 = arith.constant 0 : index
    %c0_17 = arith.constant 0 : index
    %23 = vector.load %arg8[%c0_16, %c0_17] : memref<1x128xf32, #tpu.memory_space<vmem>>, vector<1x128xf32>
    tpu.vector_store %arg8[%c0_16, %c0_17], %22 {strides = array<i32>} : memref<1x128xf32, #tpu.memory_space<vmem>>, vector<1x128xf32>,
    return
  }
  func.func @transform_0(%arg0: i32) -> (i32, i32) {
    %c0_i32 = arith.constant 0 : i32
    %c0_i32_0 = arith.constant 0 : i32
    return %arg0, %c0_i32 : i32, i32
  }
  func.func @transform_1(%arg0: i32) -> (i32, i32) {
    %c0_i32 = arith.constant 0 : i32
    %c0_i32_0 = arith.constant 0 : i32
    %c0_i32_1 = arith.constant 0 : i32
    return %c0_i32, %c0_i32_0 : i32, i32
  }
  func.func @transform_2(%arg0: i32) -> (i32, i32) {
    %c0_i32 = arith.constant 0 : i32
    %c0_i32_0 = arith.constant 0 : i32
    %c0_i32_1 = arith.constant 0 : i32
    return %c0_i32, %c0_i32_0 : i32, i32
  }
  func.func @transform_3(%arg0: i32) -> (i32, i32) {
    %c0_i32 = arith.constant 0 : i32
    %c0_i32_0 = arith.constant 0 : i32
    %c0_i32_1 = arith.constant 0 : i32
    return %c0_i32, %c0_i32_0 : i32, i32
  }
  func.func @transform_4(%arg0: i32) -> (i32, i32) {
    %c0_i32 = arith.constant 0 : i32
    %c0_i32_0 = arith.constant 0 : i32
    %c0_i32_1 = arith.constant 0 : i32
    return %c0_i32, %c0_i32_0 : i32, i32
  }
  func.func @transform_5(%arg0: i32) -> (i32, i32) {
    %c0_i32 = arith.constant 0 : i32
    %c0_i32_0 = arith.constant 0 : i32
    %c0_i32_1 = arith.constant 0 : i32
    return %c0_i32, %c0_i32_0 : i32, i32
  }
  func.func @transform_6(%arg0: i32) -> i32 {
    %c0_i32 = arith.constant 0 : i32
    %c0_i32_0 = arith.constant 0 : i32
    return %c0_i32 : i32
  }
  func.func @transform_7(%arg0: i32) -> (i32, i32) {
    %c0_i32 = arith.constant 0 : i32
    %c0_i32_0 = arith.constant 0 : i32
    return %c0_i32, %arg0 : i32, i32
  }
}

</mosaic_0001>

<llo_original>
// kernel: mlp_forward.1
$region0: #{mlp_forward.1}
  #allocation0 [shape = 'u32[]', space=smem, size = 0x4, offset = 0x4, fixed_abs, tag = 'smem constant byte address 0x4 - core index']
  #allocation1 [shape = 'u32[144,128]{1,0:T(1,128)}', space=vmem, size = 0x12000, scoped, tag = 'internal scratch']
  #allocation2 [shape = 'f32[1]{0:T(128)S(6)}', space=smem, size = 0x200, scoped, tag = 'scoped memory for mlp_forward.1']
  %s0 = inlined_call_operand.vmem [shape: f32[128,32], index: 0, kind: input, shape index: {}]
  %s1 = inlined_call_operand.vmem [shape: f32[32,32], index: 1, kind: input, shape index: {}]
  %s2 = inlined_call_operand.vmem [shape: f32[32,1], index: 2, kind: input, shape index: {}]
  %s3 = inlined_call_operand.vmem [shape: f32[32,32], index: 3, kind: input, shape index: {}]
  %s4 = inlined_call_operand.vmem [shape: f32[32,1], index: 4, kind: input, shape index: {}]
  %s5 = inlined_call_operand.vmem [shape: f32[32,1], index: 5, kind: input, shape index: {}]
  %s6 = inlined_call_operand.<no memory space> [shape: f32[1], index: 6, kind: input, shape index: {}]
  %s7 = inlined_call_operand.vmem [shape: f32[1,128], index: 7, kind: output, shape index: {}]
  %s8 = sld [smem:[#allocation0]]
  $region38: #{mlp_forward.1} parent=0
    _
  %s10 = ssub.s32 1, %s8
  %s11 = scalar_select 0, %s10, %s8
  %12 = sst [smem:[#allocation2]] %s6
  // Predicated region
  $region2: #{mlp_forward.1} parent=0 // pred_check
    _
  $region3: #{mlp_forward.1} parent=0 // pred_check_branch
    %14 = sbr.rel (0) target = $region5
  $region4: #{mlp_forward.1} parent=0 // pred_region
    _
  $region5: #{mlp_forward.1} parent=0 // pred_fallthru
    _
  // Predicated region
  $region6: #{mlp_forward.1} parent=0 // pred_check
    _
  $region7: #{mlp_forward.1} parent=0 // pred_check_branch
    %16 = sbr.rel (0) target = $region9
  $region8: #{mlp_forward.1} parent=0 // pred_region
    _
  $region9: #{mlp_forward.1} parent=0 // pred_fallthru
    _
  // Predicated region
  $region10: #{mlp_forward.1} parent=0 // pred_check
    _
  $region11: #{mlp_forward.1} parent=0 // pred_check_branch
    %18 = sbr.rel (0) target = $region13
  $region12: #{mlp_forward.1} parent=0 // pred_region
    _
  $region13: #{mlp_forward.1} parent=0 // pred_fallthru
    _
  // Predicated region
  $region14: #{mlp_forward.1} parent=0 // pred_check
    _
  $region15: #{mlp_forward.1} parent=0 // pred_check_branch
    %20 = sbr.rel (0) target = $region17
  $region16: #{mlp_forward.1} parent=0 // pred_region
    _
  $region17: #{mlp_forward.1} parent=0 // pred_fallthru
    _
  // Predicated region
  $region18: #{mlp_forward.1} parent=0 // pred_check
    _
  $region19: #{mlp_forward.1} parent=0 // pred_check_branch
    %22 = sbr.rel (0) target = $region21
  $region20: #{mlp_forward.1} parent=0 // pred_region
    _
  $region21: #{mlp_forward.1} parent=0 // pred_fallthru
    _
  // Predicated region
  $region22: #{mlp_forward.1} parent=0 // pred_check
    _
  $region23: #{mlp_forward.1} parent=0 // pred_check_branch
    %24 = sbr.rel (0) target = $region25
  $region24: #{mlp_forward.1} parent=0 // pred_region
    _
  $region25: #{mlp_forward.1} parent=0 // pred_fallthru
    _
  // Predicated region
  $region26: #{mlp_forward.1} parent=0 // pred_check
    _
  $region27: #{mlp_forward.1} parent=0 // pred_check_branch
    %26 = sbr.rel (0) target = $region29
  $region28: #{mlp_forward.1} parent=0 // pred_region
    _
  $region29: #{mlp_forward.1} parent=0 // pred_fallthru
    _
  %v27 = vld [vmem:[%s1] sm:$0xff]
  %v28 = vld [vmem:[%s1 + $0x8] sm:$0xff]
  %v29 = vld [vmem:[%s1 + $0x10] sm:$0xff]
  %v30 = vld [vmem:[%s1 + $0x18] sm:$0xff]
  %v31 = vld [vmem:[%s0] sm:$0xff]
  %v32 = vld [vmem:[%s0 + $0x8] sm:$0xff]
  %v33 = vld [vmem:[%s0 + $0x10] sm:$0xff]
  %v34 = vld [vmem:[%s0 + $0x18] sm:$0xff]
  %v35 = vld [vmem:[%s0 + $0x20] sm:$0xff]
  %v36 = vld [vmem:[%s0 + $0x28] sm:$0xff]
  %v37 = vld [vmem:[%s0 + $0x30] sm:$0xff]
  %v38 = vld [vmem:[%s0 + $0x38] sm:$0xff]
  %v39 = vld [vmem:[%s0 + $0x40] sm:$0xff]
  %v40 = vld [vmem:[%s0 + $0x48] sm:$0xff]
  %v41 = vld [vmem:[%s0 + $0x50] sm:$0xff]
  %v42 = vld [vmem:[%s0 + $0x58] sm:$0xff]
  %v43 = vld [vmem:[%s0 + $0x60] sm:$0xff]
  %v44 = vld [vmem:[%s0 + $0x68] sm:$0xff]
  %v45 = vld [vmem:[%s0 + $0x70] sm:$0xff]
  %v46 = vld [vmem:[%s0 + $0x78] sm:$0xff]
  %v47 = vld [vmem:[%s2] sm:$0xff]
  %v48 = vld [vmem:[%s2 + $0x8] sm:$0xff]
  %v49 = vld [vmem:[%s2 + $0x10] sm:$0xff]
  %v50 = vld [vmem:[%s2 + $0x18] sm:$0xff]
  %52 = vset.pattern.permute.xlu0 0
  %53 = vperm.xlu0 %52, %v47
  %v54 = vpop.permute.xlu0 %53
  %57 = vset.pattern.permute.xlu0 0
  %58 = vperm.xlu0 %57, %v48
  %v59 = vpop.permute.xlu0 %58
  %62 = vset.pattern.permute.xlu0 0
  %63 = vperm.xlu0 %62, %v49
  %v64 = vpop.permute.xlu0 %63
  %67 = vset.pattern.permute.xlu0 0
  %68 = vperm.xlu0 %67, %v50
  %v69 = vpop.permute.xlu0 %68
  %vm71 = vcmask 261120
  %v73 = vsel %vm71, %v27, 0
  %v76 = vsel %vm71, %v28, 0
  %v79 = vsel %vm71, %v29, 0
  %v82 = vsel %vm71, %v30, 0
  %v85 = vsel %vm71, %v31, 0
  %v88 = vsel %vm71, %v32, 0
  %v91 = vsel %vm71, %v33, 0
  %v94 = vsel %vm71, %v34, 0
  %v97 = vsel %vm71, %v35, 0
  %v100 = vsel %vm71, %v36, 0
  %v103 = vsel %vm71, %v37, 0
  %v106 = vsel %vm71, %v38, 0
  %v109 = vsel %vm71, %v39, 0
  %v112 = vsel %vm71, %v40, 0
  %v115 = vsel %vm71, %v41, 0
  %v118 = vsel %vm71, %v42, 0
  %v121 = vsel %vm71, %v43, 0
  %v124 = vsel %vm71, %v44, 0
  %v127 = vsel %vm71, %v45, 0
  %v130 = vsel %vm71, %v46, 0
  %132 = vmatprep.subr.mxu0 0.0
  %133 = vmatpush1.xpose.msra.mxu0 %v85
  %134 = vmatprep.subr.mxu0 0.0
  %135 = vmatpush1.xpose.msra.mxu0 %v88
  %136 = vmatprep.subr.mxu0 0.0
  %137 = vmatpush1.xpose.msra.mxu0 %v91
  %138 = vmatprep.subr.mxu0 0.0
  %139 = vmatpush1.xpose.msra.mxu0 %v94
  %140 = vmatprep.subr.mxu0 0.0
  %141 = vmatpush1.xpose.msra.mxu0 %v97
  %142 = vmatprep.subr.mxu0 0.0
  %143 = vmatpush1.xpose.msra.mxu0 %v100
  %144 = vmatprep.subr.mxu0 0.0
  %145 = vmatpush1.xpose.msra.mxu0 %v103
  %146 = vmatprep.subr.mxu0 0.0
  %147 = vmatpush1.xpose.msra.mxu0 %v106
  %148 = vmatprep.subr.mxu0 0.0
  %149 = vmatpush1.xpose.msra.mxu0 %v109
  %150 = vmatprep.subr.mxu0 0.0
  %151 = vmatpush1.xpose.msra.mxu0 %v112
  %152 = vmatprep.subr.mxu0 0.0
  %153 = vmatpush1.xpose.msra.mxu0 %v115
  %154 = vmatprep.subr.mxu0 0.0
  %155 = vmatpush1.xpose.msra.mxu0 %v118
  %156 = vmatprep.subr.mxu0 0.0
  %157 = vmatpush1.xpose.msra.mxu0 %v121
  %158 = vmatprep.subr.mxu0 0.0
  %159 = vmatpush1.xpose.msra.mxu0 %v124
  %160 = vmatprep.subr.mxu0 0.0
  %161 = vmatpush1.xpose.msra.mxu0 %v127
  %162 = vmatprep.subr.mxu0 0.0
  %163 = vmatpush1.xpose.msra.mxu0 %v130
  %164 = vmatprep.subr.mxu0 0.0
  %165 = vmatpush1.xpose.msra.mxu0 0.0
  %166 = vmatprep.subr.mxu0 0.0
  %167 = vmatpush1.xpose.msra.mxu0 0.0
  %168 = vmatprep.subr.mxu0 0.0
  %169 = vmatpush1.xpose.msra.mxu0 0.0
  %170 = vmatprep.subr.mxu0 0.0
  %171 = vmatpush1.xpose.msra.mxu0 0.0
  %172 = vmatprep.subr.mxu0 0.0
  %173 = vmatpush1.xpose.msra.mxu0 0.0
  %174 = vmatprep.subr.mxu0 0.0
  %175 = vmatpush1.xpose.msra.mxu0 0.0
  %176 = vmatprep.subr.mxu0 0.0
  %177 = vmatpush1.xpose.msra.mxu0 0.0
  %178 = vmatprep.subr.mxu0 0.0
  %179 = vmatpush1.xpose.msra.mxu0 0.0
  %180 = vmatprep.subr.mxu0 0.0
  %181 = vmatpush1.xpose.msra.mxu0 0.0
  %182 = vmatprep.subr.mxu0 0.0
  %183 = vmatpush1.xpose.msra.mxu0 0.0
  %184 = vmatprep.subr.mxu0 0.0
  %185 = vmatpush1.xpose.msra.mxu0 0.0
  %186 = vmatprep.subr.mxu0 0.0
  %187 = vmatpush1.xpose.msra.mxu0 0.0
  %188 = vmatprep.subr.mxu0 0.0
  %189 = vmatpush1.xpose.msra.mxu0 0.0
  %190 = vmatprep.subr.mxu0 0.0
  %191 = vmatpush1.xpose.msra.mxu0 0.0
  %192 = vmatprep.subr.mxu0 0.0
  %193 = vmatpush1.xpose.msra.mxu0 0.0
  %194 = vmatprep.subr.mxu0 0.0
  %195 = vmatpush1.xpose.msra.mxu0 0.0
  %196 = vmatprep.mubr.f32.mxu0 0.0
  %197 = vmatmul.mubr.f32.gmra.mrb[0].mxu0 %v73
  %v198 = vpop.f32.mrb[0].mxu0
  %v199 = vadd.f32 %v54, %v198
  %v200 = vpop.f32.mrb[0].mxu0
  %201 = vmatprep.mubr.f32.mxu0 0.0
  %202 = vmatmul.mubr.f32.gmra.mrb[0].mxu0 %v76
  %v203 = vpop.f32.mrb[0].mxu0
  %v204 = vadd.f32 %v59, %v203
  %v205 = vpop.f32.mrb[0].mxu0
  %206 = vmatprep.mubr.f32.mxu0 0.0
  %207 = vmatmul.mubr.f32.gmra.mrb[0].mxu0 %v79
  %v208 = vpop.f32.mrb[0].mxu0
  %v209 = vadd.f32 %v64, %v208
  %v210 = vpop.f32.mrb[0].mxu0
  %211 = vmatprep.mubr.f32.mxu0 0.0
  %212 = vmatmul.mubr.f32.gmra.mrb[0].mxu0 %v82
  %v213 = vpop.f32.mrb[0].mxu0
  %v214 = vadd.f32 %v69, %v213
  %v215 = vpop.f32.mrb[0].mxu0
  %216 = vdwg.mxu0
  %v217 = vmax.f32 %v199, 0.0
  %v218 = vmax.f32 %v204, 0.0
  %v219 = vmax.f32 %v209, 0.0
  %v220 = vmax.f32 %v214, 0.0
  %v221 = vld [vmem:[%s3] sm:$0xff]
  %v222 = vld [vmem:[%s3 + $0x8] sm:$0xff]
  %v223 = vld [vmem:[%s3 + $0x10] sm:$0xff]
  %v224 = vld [vmem:[%s3 + $0x18] sm:$0xff]
  %v225 = vld [vmem:[%s4] sm:$0xff]
  %v226 = vld [vmem:[%s4 + $0x8] sm:$0xff]
  %v227 = vld [vmem:[%s4 + $0x10] sm:$0xff]
  %v228 = vld [vmem:[%s4 + $0x18] sm:$0xff]
  %230 = vset.pattern.permute.xlu0 0
  %231 = vperm.xlu0 %230, %v225
  %v232 = vpop.permute.xlu0 %231
  %235 = vset.pattern.permute.xlu0 0
  %236 = vperm.xlu0 %235, %v226
  %v237 = vpop.permute.xlu0 %236
  %240 = vset.pattern.permute.xlu0 0
  %241 = vperm.xlu0 %240, %v227
  %v242 = vpop.permute.xlu0 %241
  %245 = vset.pattern.permute.xlu0 0
  %246 = vperm.xlu0 %245, %v228
  %v247 = vpop.permute.xlu0 %246
  %v250 = vsel %vm71, %v221, 0
  %v253 = vsel %vm71, %v222, 0
  %v256 = vsel %vm71, %v223, 0
  %v259 = vsel %vm71, %v224, 0
  %261 = vmatprep.subr.mxu0 0.0
  %262 = vmatpush1.msra.mxu0 %v217
  %263 = vmatprep.subr.mxu0 0.0
  %264 = vmatpush1.msra.mxu0 %v218
  %265 = vmatprep.subr.mxu0 0.0
  %266 = vmatpush1.msra.mxu0 %v219
  %267 = vmatprep.subr.mxu0 0.0
  %268 = vmatpush1.msra.mxu0 %v220
  %269 = vmatprep.subr.mxu0 0.0
  %270 = vmatpush1.msra.mxu0 0.0
  %271 = vmatprep.subr.mxu0 0.0
  %272 = vmatpush1.msra.mxu0 0.0
  %273 = vmatprep.subr.mxu0 0.0
  %274 = vmatpush1.msra.mxu0 0.0
  %275 = vmatprep.subr.mxu0 0.0
  %276 = vmatpush1.msra.mxu0 0.0
  %277 = vmatprep.subr.mxu0 0.0
  %278 = vmatpush1.msra.mxu0 0.0
  %279 = vmatprep.subr.mxu0 0.0
  %280 = vmatpush1.msra.mxu0 0.0
  %281 = vmatprep.subr.mxu0 0.0
  %282 = vmatpush1.msra.mxu0 0.0
  %283 = vmatprep.subr.mxu0 0.0
  %284 = vmatpush1.msra.mxu0 0.0
  %285 = vmatprep.subr.mxu0 0.0
  %286 = vmatpush1.msra.mxu0 0.0
  %287 = vmatprep.subr.mxu0 0.0
  %288 = vmatpush1.msra.mxu0 0.0
  %289 = vmatprep.subr.mxu0 0.0
  %290 = vmatpush1.msra.mxu0 0.0
  %291 = vmatprep.subr.mxu0 0.0
  %292 = vmatpush1.msra.mxu0 0.0
  %293 = vmatprep.subr.mxu0 0.0
  %294 = vmatpush1.msra.mxu0 0.0
  %295 = vmatprep.subr.mxu0 0.0
  %296 = vmatpush1.msra.mxu0 0.0
  %297 = vmatprep.subr.mxu0 0.0
  %298 = vmatpush1.msra.mxu0 0.0
  %299 = vmatprep.subr.mxu0 0.0
  %300 = vmatpush1.msra.mxu0 0.0
  %301 = vmatprep.subr.mxu0 0.0
  %302 = vmatpush1.msra.mxu0 0.0
  %303 = vmatprep.subr.mxu0 0.0
  %304 = vmatpush1.msra.mxu0 0.0
  %305 = vmatprep.subr.mxu0 0.0
  %306 = vmatpush1.msra.mxu0 0.0
  %307 = vmatprep.subr.mxu0 0.0
  %308 = vmatpush1.msra.mxu0 0.0
  %309 = vmatprep.subr.mxu0 0.0
  %310 = vmatpush1.msra.mxu0 0.0
  %311 = vmatprep.subr.mxu0 0.0
  %312 = vmatpush1.msra.mxu0 0.0
  %313 = vmatprep.subr.mxu0 0.0
  %314 = vmatpush1.msra.mxu0 0.0
  %315 = vmatprep.subr.mxu0 0.0
  %316 = vmatpush1.msra.mxu0 0.0
  %317 = vmatprep.subr.mxu0 0.0
  %318 = vmatpush1.msra.mxu0 0.0
  %319 = vmatprep.subr.mxu0 0.0
  %320 = vmatpush1.msra.mxu0 0.0
  %321 = vmatprep.subr.mxu0 0.0
  %322 = vmatpush1.msra.mxu0 0.0
  %323 = vmatprep.subr.mxu0 0.0
  %324 = vmatpush1.msra.mxu0 0.0
  %325 = vmatprep.mubr.f32.mxu0 0.0
  %326 = vmatmul.mubr.f32.gmra.mrb[0].mxu0 %v250
  %v327 = vpop.f32.mrb[0].mxu0
  %v328 = vadd.f32 %v232, %v327
  %v329 = vpop.f32.mrb[0].mxu0
  %330 = vmatprep.mubr.f32.mxu0 0.0
  %331 = vmatmul.mubr.f32.gmra.mrb[0].mxu0 %v253
  %v332 = vpop.f32.mrb[0].mxu0
  %v333 = vadd.f32 %v237, %v332
  %v334 = vpop.f32.mrb[0].mxu0
  %335 = vmatprep.mubr.f32.mxu0 0.0
  %336 = vmatmul.mubr.f32.gmra.mrb[0].mxu0 %v256
  %v337 = vpop.f32.mrb[0].mxu0
  %v338 = vadd.f32 %v242, %v337
  %v339 = vpop.f32.mrb[0].mxu0
  %340 = vmatprep.mubr.f32.mxu0 0.0
  %341 = vmatmul.mubr.f32.gmra.mrb[0].mxu0 %v259
  %v342 = vpop.f32.mrb[0].mxu0
  %v343 = vadd.f32 %v247, %v342
  %v344 = vpop.f32.mrb[0].mxu0
  %345 = vdwg.mxu0
  %v346 = vmax.f32 %v328, 0.0
  %v347 = vmax.f32 %v333, 0.0
  %v348 = vmax.f32 %v338, 0.0
  %v349 = vmax.f32 %v343, 0.0
  %v350 = vld [vmem:[%s5] sm:$0xff]
  %v351 = vld [vmem:[%s5 + $0x8] sm:$0xff]
  %v352 = vld [vmem:[%s5 + $0x10] sm:$0xff]
  %v353 = vld [vmem:[%s5 + $0x18] sm:$0xff]
  %355 = vset.pattern.permute.xlu0 0
  %356 = vperm.xlu0 %355, %v350
  %v357 = vpop.permute.xlu0 %356
  %360 = vset.pattern.permute.xlu0 0
  %361 = vperm.xlu0 %360, %v351
  %v362 = vpop.permute.xlu0 %361
  %365 = vset.pattern.permute.xlu0 0
  %366 = vperm.xlu0 %365, %v352
  %v367 = vpop.permute.xlu0 %366
  %370 = vset.pattern.permute.xlu0 0
  %371 = vperm.xlu0 %370, %v353
  %v372 = vpop.permute.xlu0 %371
  %v374 = vmul.f32 %v357, %v346
  %v375 = vmul.f32 %v362, %v347
  %v376 = vmul.f32 %v367, %v348
  %v377 = vmul.f32 %v372, %v349
  %v378 = vadd.f32 %v374, %v375
  %v379 = vadd.f32 %v378, %v376
  %v380 = vadd.f32 %v379, %v377
  %v381 = vrot.slane %v380, 4
  %v382 = vadd.f32 %v380, %v381
  %v383 = vrot.slane %v382, 2
  %v384 = vadd.f32 %v382, %v383
  %v385 = vrot.slane %v384, 1
  %v386 = vadd.f32 %v384, %v385
  %s387 = sld [smem:[#allocation2]]
  %v388 = vstv %s387
  %v389 = vadd.f32 %v386, %v388
  %390 = vst [vmem:[%s7] sm:$0x1] %v389
  // Predicated region
  $region30: #{mlp_forward.1} parent=0 // pred_check
    _
  $region31: #{mlp_forward.1} parent=0 // pred_check_branch
    %392 = sbr.rel (0) target = $region33
  $region32: #{mlp_forward.1} parent=0 // pred_region
    _
  $region33: #{mlp_forward.1} parent=0 // pred_fallthru
    _
  // Predicated region
  $region34: #{mlp_forward.1} parent=0 // pred_check
    _
  $region35: #{mlp_forward.1} parent=0 // pred_check_branch
    %394 = sbr.rel (0) target = $region37
  $region36: #{mlp_forward.1} parent=0 // pred_region
    _
  $region37: #{mlp_forward.1} parent=0 // pred_fallthru
    _

</llo_original>
